<compile_context>
chip_gen: v7x
topology: tpu7x:2x2x1
jax: 0.10.0
libtpu: 0.0.40
codegen_flags: <defaults>
</compile_context>

<pallas_src>
import functools

import jax
import jax.numpy as jnp
from jax import lax
from jax.experimental import pallas as pl
from jax.experimental.pallas import tpu as pltpu


def gcn_kernel(x_ref, adj_ref, th1_ref, th2_ref, o_ref,
               l1_scr, h1_scr, p2_scr, *, reassoc_l1):
    # x_ref  : (bb*N, F_in)        bf16  batch folded into rows
    # adj_ref: (N, N)              bf16  grid-invariant, single-buffered
    # th1_ref: (F_in, H)           bf16  grid-invariant, single-buffered
    # th2_ref: (H, F_out_pad)      bf16  grid-invariant, single-buffered, zero lane padding
    # o_ref  : (bb, N, F_out_pad)  bf16
    # l1_scr : (bb*N, F_in) or (bb*N, H)  bf16 scratch (layer-1 intermediate)
    # h1_scr : (bb*N, H)           bf16 scratch (relu'd layer-1 output)
    # p2_scr : (bb*N, F_out_pad)   bf16 scratch (layer-2 projection)
    bb, n, _ = o_ref.shape
    adj = adj_ref[...]

    if reassoc_l1:
        # ---- layer 1 (reassociated): h1 = relu((adj @ x) @ theta1) -------------
        # propagate first: N^2*F_in MACs per batch instead of N^2*H
        def prop1(b, carry):
            r = pl.multiple_of(b * n, n)
            ax = jnp.dot(adj, x_ref[pl.ds(r, n), :],
                         preferred_element_type=jnp.float32)        # (N, F_in) f32
            l1_scr[pl.ds(r, n), :] = ax.astype(l1_scr.dtype)
            return carry
        lax.fori_loop(0, bb, prop1, 0, unroll=True)

        h1 = jnp.dot(l1_scr[...], th1_ref[...],
                     preferred_element_type=jnp.float32)             # (bb*N, H) f32
        h1_scr[...] = jnp.maximum(h1, 0.0).astype(h1_scr.dtype)
    else:
        # ---- layer 1 (original order): h1 = relu(adj @ (x @ theta1)) -----------
        xw = jnp.dot(x_ref[...], th1_ref[...],
                     preferred_element_type=jnp.float32)             # (bb*N, H) f32
        l1_scr[...] = xw.astype(l1_scr.dtype)

        def prop1(b, carry):
            r = pl.multiple_of(b * n, n)
            hb = jnp.dot(adj, l1_scr[pl.ds(r, n), :],
                         preferred_element_type=jnp.float32)         # (N, H) f32
            h1_scr[pl.ds(r, n), :] = jnp.maximum(hb, 0.0).astype(h1_scr.dtype)
            return carry
        lax.fori_loop(0, bb, prop1, 0, unroll=True)

    # ---- layer 2: out = sigmoid(relu(adj @ (h1 @ theta2))) ---------------------
    p2 = jnp.dot(h1_scr[...], th2_ref[...],
                 preferred_element_type=jnp.float32)                  # (bb*N, F_out_pad) f32
    p2_scr[...] = p2.astype(p2_scr.dtype)

    def prop2(b, carry):
        r = pl.multiple_of(b * n, n)
        hb = jnp.dot(adj, p2_scr[pl.ds(r, n), :],
                     preferred_element_type=jnp.float32)              # (N, F_out_pad) f32
        o_ref[b] = jax.nn.sigmoid(jnp.maximum(hb, 0.0)).astype(o_ref.dtype)
        return carry
    lax.fori_loop(0, bb, prop2, 0, unroll=True)


def _pick_batch_block(B, N, F_in, hidden, f_out_pad,
                      vmem_budget_bytes=24 * 1024 * 1024):
    """Largest bb (divisor of B) fitting the VMEM budget, while keeping >= 2 grid steps."""
    # grid-invariant residents (single-buffered, bf16)
    fixed = 2 * (N * N + F_in * hidden + hidden * f_out_pad)
    # per-unit-of-bb bytes: double-buffered x/out blocks (bf16), the three bf16 scratch
    # buffers, and the largest live f32 projection produced by the big dots
    per_bb = (2 * 2 * N * (F_in + f_out_pad)
              + 2 * N * (min(F_in, hidden) + hidden + f_out_pad)
              + 4 * N * max(hidden, f_out_pad))
    bb = max(1, (vmem_budget_bytes - fixed) // per_bb)
    if B >= 2:
        bb = min(bb, B // 2)   # >= 2 grid steps: DMA pipelining + v7x megacore sharding
    bb = max(1, min(bb, B))
    while B % bb:
        bb -= 1
    return int(bb)


def gcn_forward(x, adj, theta1, theta2, *, batch_block=None):
    """x: (B, N, F_in), adj: (N, N), theta1: (F_in, H), theta2: (H, F_out); all f32."""
    B, N, F_in = x.shape
    hidden = theta1.shape[1]
    F_out = theta2.shape[1]
    assert adj.shape == (N, N)
    assert theta1.shape == (F_in, hidden)
    assert theta2.shape == (hidden, F_out)
    assert N % 8 == 0, "num_of_nodes must be 8-aligned for the (8,128) tiling"

    LANE = 128
    f_out_pad = pl.cdiv(F_out, LANE) * LANE

    # (adj @ x) @ theta1 == adj @ (x @ theta1); the former is cheaper when F_in < hidden.
    reassoc_l1 = F_in < hidden

    if batch_block is None:
        bb = _pick_batch_block(B, N, F_in, hidden, f_out_pad)
    else:
        bb = max(1, min(batch_block, B))
        while B % bb:
            bb -= 1
    n_blocks = B // bb
    if bb != B:
        # bf16 sublane packing: batch-block row count should be 16-aligned
        assert (bb * N) % 16 == 0, "pad N (or pass batch_block=B) for bf16 row packing"

    # bf16 operands (native MXU path), f32 accumulation inside the kernel.
    x_flat = x.reshape(B * N, F_in).astype(jnp.bfloat16)
    adj_bf = adj.astype(jnp.bfloat16)
    th1_bf = theta1.astype(jnp.bfloat16)
    th2_bf = jnp.pad(theta2, ((0, 0), (0, f_out_pad - F_out))).astype(jnp.bfloat16)

    l1_cols = F_in if reassoc_l1 else hidden

    prop_flops = N * N * (F_in if reassoc_l1 else hidden) + N * N * f_out_pad
    proj_flops = N * F_in * hidden + N * hidden * f_out_pad
    flops = 2 * B * (prop_flops + proj_flops)
    bytes_accessed = (2 * (B * N * F_in + N * N + F_in * hidden + hidden * f_out_pad)
                      + 2 * B * N * f_out_pad)

    out_padded = pl.pallas_call(
        functools.partial(gcn_kernel, reassoc_l1=reassoc_l1),
        out_shape=jax.ShapeDtypeStruct((B, N, f_out_pad), jnp.bfloat16),
        grid_spec=pltpu.PrefetchScalarGridSpec(
            num_scalar_prefetch=0,
            grid=(n_blocks,),
            in_specs=[
                # per-block batch rows (double-buffered by default -> pipelined DMA)
                pl.BlockSpec((bb * N, F_in), lambda i: (i, 0)),
                # grid-invariant operands: single-buffered (no double-buffer VMEM waste)
                pl.BlockSpec((N, N), lambda i: (0, 0),
                             pipeline_mode=pl.Buffered(1)),
                pl.BlockSpec((F_in, hidden), lambda i: (0, 0),
                             pipeline_mode=pl.Buffered(1)),
                pl.BlockSpec((hidden, f_out_pad), lambda i: (0, 0),
                             pipeline_mode=pl.Buffered(1)),
            ],
            out_specs=pl.BlockSpec((bb, N, f_out_pad), lambda i: (i, 0, 0)),
            scratch_shapes=[
                pltpu.VMEM((bb * N, l1_cols), jnp.bfloat16),
                pltpu.VMEM((bb * N, hidden), jnp.bfloat16),
                pltpu.VMEM((bb * N, f_out_pad), jnp.bfloat16),
            ],
        ),
        compiler_params=pltpu.CompilerParams(
            dimension_semantics=("parallel",),     # batch-block axis shards across TCs on v7x
            vmem_limit_bytes=48 * 1024 * 1024,     # > v5e 16 MiB default, < v7x 64 MiB physical
        ),
        cost_estimate=pl.CostEstimate(
            flops=int(flops),
            transcendentals=int(B * N * f_out_pad),
            bytes_accessed=int(bytes_accessed),
        ),
    )(x_flat, adj_bf, th1_bf, th2_bf)

    # Strip lane padding (padded cols hold sigmoid(relu(0)) = 0.5) and restore f32.
    return out_padded[:, :, :F_out].astype(jnp.float32)


if __name__ == "__main__":
    # Small shapes consistent with GCN(K, in_dim, out_dim, num_of_nodes, DEVICE):
    # in_dim=8, hidden (layer-1 out) = 128, out_dim=32, num_of_nodes=16, batch=2.
    B, N, F_in, HIDDEN, F_out = 2, 16, 8, 128, 32

    key = jax.random.PRNGKey(0)
    k_x, k_adj, k_t1, k_t2 = jax.random.split(key, 4)

    x = jax.random.normal(k_x, (B, N, F_in), dtype=jnp.float32)
    # simple symmetric, row-normalized adjacency-like matrix
    a = jax.random.uniform(k_adj, (N, N), dtype=jnp.float32)
    adj = (a + a.T) * 0.5
    adj = adj / jnp.sum(adj, axis=-1, keepdims=True)

    # torch.rand -> uniform [0, 1)
    theta1 = jax.random.uniform(k_t1, (F_in, HIDDEN), dtype=jnp.float32)
    theta2 = jax.random.uniform(k_t2, (HIDDEN, F_out), dtype=jnp.float32)

    out = gcn_forward(x, adj, theta1, theta2)
    out = jax.block_until_ready(out)

    # f32 reference with the exact PyTorch semantics (relu in both layers, then sigmoid).
    h1 = jnp.maximum(jnp.einsum("ij,bjk->bik", adj, x @ theta1), 0.0)
    h2 = jnp.maximum(jnp.einsum("ij,bjk->bik", adj, h1 @ theta2), 0.0)
    ref = jax.nn.sigmoid(h2)

    assert out.shape == (B, N, F_out)
    # bf16 operands/intermediates, bf16 output and layer-1 reassociation -> loosened tolerance.
    assert jnp.allclose(out, ref, atol=3e-2, rtol=3e-2), "mismatch vs reference"

    print("KERNEL_OK")
</pallas_src>

<mosaic_0001>
module attributes {stable_mosaic.version = 11 : i64} {
  func.func @gcn_kernel(%arg0: i32, %arg1: memref<16x8xbf16, #tpu.memory_space<vmem>>, %arg2: memref<16x16xbf16, #tpu.memory_space<vmem>>, %arg3: memref<8x128xbf16, #tpu.memory_space<vmem>>, %arg4: memref<128x128xbf16, #tpu.memory_space<vmem>>, %arg5: memref<1x16x128xbf16, #tpu.memory_space<vmem>>, %arg6: memref<16x8xbf16, #tpu.memory_space<vmem>>, %arg7: memref<16x128xbf16, #tpu.memory_space<vmem>>, %arg8: memref<16x128xbf16, #tpu.memory_space<vmem>>) attributes {dimension_semantics = [#tpu.dimension_semantics<parallel>], iteration_bounds = array<i64: 2>, scalar_prefetch = 0 : i64, scratch_operands = 3 : i64, tpu.core_type = #tpu.core_type<tc>, window_params = [{transform_indices = @transform_0, window_bounds = array<i64: 16, 8>}, {pipeline_mode = #tpu.pipeline_mode<synchronous>, transform_indices = @transform_1, window_bounds = array<i64: 16, 16>}, {pipeline_mode = #tpu.pipeline_mode<synchronous>, transform_indices = @transform_2, window_bounds = array<i64: 8, 128>}, {pipeline_mode = #tpu.pipeline_mode<synchronous>, transform_indices = @transform_3, window_bounds = array<i64: 128, 128>}, {transform_indices = @transform_4, window_bounds = array<i64: 1, 16, 128>}]} {
    %c0 = arith.constant 0 : index
    %c0_0 = arith.constant 0 : index
    %0 = vector.load %arg2[%c0, %c0_0] : memref<16x16xbf16, #tpu.memory_space<vmem>>, vector<16x16xbf16>
    %c0_i32 = arith.constant 0 : i32
    %c16_i32 = arith.constant 16 : i32
    %1 = arith.muli %c0_i32, %c16_i32 : i32
    %2 = tpu.assume_multiple %1, 16 : i32
    %3 = arith.index_cast %2 : i32 to index
    %c0_1 = arith.constant 0 : index
    %4 = vector.load %arg1[%3, %c0_1] : memref<16x8xbf16, #tpu.memory_space<vmem>>, vector<16x8xbf16>
    %cst = arith.constant dense<0.000000e+00> : vector<16x8xf32>
    %5 = tpu.matmul %0, %4, %cst {dimension_numbers = #tpu.dot_dimension_numbers<[1], [0], [0], [1], [0, 0, 1, 1], [], []>} : vector<16x16xbf16>, vector<16x8xbf16>, vector<16x8xf32> -> vector<16x8xf32>
    %6 = arith.truncf %5 : vector<16x8xf32> to vector<16x8xbf16>
    %7 = arith.index_cast %2 : i32 to index
    %c0_2 = arith.constant 0 : index
    %8 = vector.load %arg6[%7, %c0_2] : memref<16x8xbf16, #tpu.memory_space<vmem>>, vector<16x8xbf16>
    tpu.vector_store %arg6[%7, %c0_2], %6 {strides = array<i32>} : memref<16x8xbf16, #tpu.memory_space<vmem>>, vector<16x8xbf16>,
    %c1_i32 = arith.constant 1 : i32
    %c0_3 = arith.constant 0 : index
    %c0_4 = arith.constant 0 : index
    %9 = vector.load %arg6[%c0_3, %c0_4] : memref<16x8xbf16, #tpu.memory_space<vmem>>, vector<16x8xbf16>
    %c0_5 = arith.constant 0 : index
    %c0_6 = arith.constant 0 : index
    %10 = vector.load %arg3[%c0_5, %c0_6] : memref<8x128xbf16, #tpu.memory_space<vmem>>, vector<8x128xbf16>
    %cst_7 = arith.constant dense<0.000000e+00> : vector<16x128xf32>
    %11 = tpu.matmul %9, %10, %cst_7 {dimension_numbers = #tpu.dot_dimension_numbers<[1], [0], [0], [1], [0, 0, 1, 1], [], []>} : vector<16x8xbf16>, vector<8x128xbf16>, vector<16x128xf32> -> vector<16x128xf32>
    %cst_8 = arith.constant 0.000000e+00 : f32
    %12 = vector.broadcast %cst_8 : f32 to vector<16x128xf32>
    %13 = arith.maximumf %11, %12 : vector<16x128xf32>
    %14 = arith.truncf %13 : vector<16x128xf32> to vector<16x128xbf16>
    %c0_9 = arith.constant 0 : index
    %c0_10 = arith.constant 0 : index
    %15 = vector.load %arg7[%c0_9, %c0_10] : memref<16x128xbf16, #tpu.memory_space<vmem>>, vector<16x128xbf16>
    tpu.vector_store %arg7[%c0_9, %c0_10], %14 {strides = array<i32>} : memref<16x128xbf16, #tpu.memory_space<vmem>>, vector<16x128xbf16>,
    %c0_11 = arith.constant 0 : index
    %c0_12 = arith.constant 0 : index
    %16 = vector.load %arg7[%c0_11, %c0_12] : memref<16x128xbf16, #tpu.memory_space<vmem>>, vector<16x128xbf16>
    %c0_13 = arith.constant 0 : index
    %c0_14 = arith.constant 0 : index
    %17 = vector.load %arg4[%c0_13, %c0_14] : memref<128x128xbf16, #tpu.memory_space<vmem>>, vector<128x128xbf16>
    %cst_15 = arith.constant dense<0.000000e+00> : vector<16x128xf32>
    %18 = tpu.matmul %16, %17, %cst_15 {dimension_numbers = #tpu.dot_dimension_numbers<[1], [0], [0], [1], [0, 0, 1, 1], [], []>} : vector<16x128xbf16>, vector<128x128xbf16>, vector<16x128xf32> -> vector<16x128xf32>
    %19 = arith.truncf %18 : vector<16x128xf32> to vector<16x128xbf16>
    %c0_16 = arith.constant 0 : index
    %c0_17 = arith.constant 0 : index
    %20 = vector.load %arg8[%c0_16, %c0_17] : memref<16x128xbf16, #tpu.memory_space<vmem>>, vector<16x128xbf16>
    tpu.vector_store %arg8[%c0_16, %c0_17], %19 {strides = array<i32>} : memref<16x128xbf16, #tpu.memory_space<vmem>>, vector<16x128xbf16>,
    %c0_i32_18 = arith.constant 0 : i32
    %c16_i32_19 = arith.constant 16 : i32
    %21 = arith.muli %c0_i32_18, %c16_i32_19 : i32
    %22 = tpu.assume_multiple %21, 16 : i32
    %23 = arith.index_cast %22 : i32 to index
    %c0_20 = arith.constant 0 : index
    %24 = vector.load %arg8[%23, %c0_20] : memref<16x128xbf16, #tpu.memory_space<vmem>>, vector<16x128xbf16>
    %cst_21 = arith.constant dense<0.000000e+00> : vector<16x128xf32>
    %25 = tpu.matmul %0, %24, %cst_21 {dimension_numbers = #tpu.dot_dimension_numbers<[1], [0], [0], [1], [0, 0, 1, 1], [], []>} : vector<16x16xbf16>, vector<16x128xbf16>, vector<16x128xf32> -> vector<16x128xf32>
    %cst_22 = arith.constant 0.000000e+00 : f32
    %26 = vector.broadcast %cst_22 : f32 to vector<16x128xf32>
    %27 = arith.maximumf %25, %26 : vector<16x128xf32>
    %28 = arith.negf %27 : vector<16x128xf32>
    %29 = math.exp %28 : vector<16x128xf32>
    %cst_23 = arith.constant 1.000000e+00 : f32
    %30 = vector.broadcast %cst_23 : f32 to vector<16x128xf32>
    %31 = arith.addf %30, %29 : vector<16x128xf32>
    %32 = arith.divf %30, %31 : vector<16x128xf32>
    %33 = arith.truncf %32 : vector<16x128xf32> to vector<16x128xbf16>
    %34 = arith.index_cast %c0_i32_18 : i32 to index
    %c0_24 = arith.constant 0 : index
    %c0_25 = arith.constant 0 : index
    %35 = vector.load %arg5[%34, %c0_24, %c0_25] : memref<1x16x128xbf16, #tpu.memory_space<vmem>>, vector<1x16x128xbf16>
    %36 = vector.shape_cast %35 : vector<1x16x128xbf16> to vector<16x128xbf16>
    %37 = vector.shape_cast %33 : vector<16x128xbf16> to vector<1x16x128xbf16>
    tpu.vector_store %arg5[%34, %c0_24, %c0_25], %37 {strides = array<i32>} : memref<1x16x128xbf16, #tpu.memory_space<vmem>>, vector<1x16x128xbf16>,
    %c1_i32_26 = arith.constant 1 : i32
    return
  }
  func.func @transform_0(%arg0: i32) -> (i32, i32) {
    %c0_i32 = arith.constant 0 : i32
    %c0_i32_0 = arith.constant 0 : i32
    return %arg0, %c0_i32 : i32, i32
  }
  func.func @transform_1(%arg0: i32) -> (i32, i32) {
    %c0_i32 = arith.constant 0 : i32
    %c0_i32_0 = arith.constant 0 : i32
    %c0_i32_1 = arith.constant 0 : i32
    return %c0_i32, %c0_i32_0 : i32, i32
  }
  func.func @transform_2(%arg0: i32) -> (i32, i32) {
    %c0_i32 = arith.constant 0 : i32
    %c0_i32_0 = arith.constant 0 : i32
    %c0_i32_1 = arith.constant 0 : i32
    return %c0_i32, %c0_i32_0 : i32, i32
  }
  func.func @transform_3(%arg0: i32) -> (i32, i32) {
    %c0_i32 = arith.constant 0 : i32
    %c0_i32_0 = arith.constant 0 : i32
    %c0_i32_1 = arith.constant 0 : i32
    return %c0_i32, %c0_i32_0 : i32, i32
  }
  func.func @transform_4(%arg0: i32) -> (i32, i32, i32) {
    %c0_i32 = arith.constant 0 : i32
    %c0_i32_0 = arith.constant 0 : i32
    %c0_i32_1 = arith.constant 0 : i32
    return %arg0, %c0_i32, %c0_i32_0 : i32, i32, i32
  }
}

</mosaic_0001>

<llo_original>
// kernel: tpu_custom_call.1
$region0: #{tpu_custom_call.1}
  #allocation0 [shape = 'u32[]', space=smem, size = 0x4, offset = 0x4, fixed_abs, tag = 'smem constant byte address 0x4 - core index']
  #allocation1 [shape = 'u32[144,128]{1,0:T(1,128)}', space=vmem, size = 0x12000, scoped, tag = 'internal scratch']
  #allocation2 [shape = 'bf16[16,8]{1,0:T(16,128)(2,1)}', space=vmem, size = 0x1000, scoped, tag = 'scratch operand']
  #allocation3 [shape = 'bf16[16,128]{1,0:T(16,128)(2,1)}', space=vmem, size = 0x1000, scoped, tag = 'scratch operand']
  #allocation4 [shape = 'bf16[16,128]{1,0:T(16,128)(2,1)}', space=vmem, size = 0x1000, scoped, tag = 'scratch operand']
  %s0 = inlined_call_operand.vmem [shape: bf16[32,8], index: 0, kind: input, shape index: {}]
  %s1 = inlined_call_operand.vmem [shape: bf16[16,16], index: 1, kind: input, shape index: {}]
  %s2 = inlined_call_operand.vmem [shape: bf16[8,128], index: 2, kind: input, shape index: {}]
  %s3 = inlined_call_operand.hbm [shape: bf16[128,128], index: 3, kind: input, shape index: {}]
  %s4 = inlined_call_operand.hbm [shape: bf16[2,16,128], index: 4, kind: output, shape index: {}]
  %s5 = sld [smem:[#allocation0]]
  $region53: #{tpu_custom_call.1} parent=0
    _
  %s7 = ssub.s32 1, %s5
  %s8 = scalar_select 0, %s7, %s5
  $region1: #{tpu_custom_call.1} parent=0
    #allocation5 [shape = 'u8[32768]{0}', space=vmem, size = 0x8000, scoped, tag = 'input window, operand 3, single buffered']
    #allocation6 [shape = 's32[2]{0}', space=sflag, size = 0x8, scoped, tag = 'scoped memory for tpu_custom_call.1']
    #allocation7 [shape = 's32[2]{0}', space=sflag, size = 0x8, scoped, tag = 'scoped memory for tpu_custom_call.1']
    #allocation8 [shape = 'u8[8192]{0}', space=vmem, size = 0x2000, scoped, tag = 'output window, operand 0']
    %9 = vsyncpa [#allocation6], 0
    %10 = vsyncpa [#allocation7], 0
    %s11 = scalar_lea.sflag [#allocation7], 1
    %12 = vsyncpa %s11, 0
    loop: start=0, step=1, limit=4
    $region2: #{tpu_custom_call.1} parent=1 // loop_pre_header
      _
    $region3: #{tpu_custom_call.1} parent=1 // loop_header
      %s14 = sphi 0, %s18
      %p15 = scmp.ge.s32.totalorder %s14, 4
      %s24 = sphi 0, %s26
      %s27 = sphi 0, %s24
      %s28 = sphi 0, %s27
      %s44 = sphi 0, %s28
      %s48 = sphi 0, %s48
      %s50 = sphi 0, %s48
      %s51 = sphi 0, %s50
      %s65 = sphi 0, %s51
      %s69 = sphi 0, %s69
      %s71 = sphi 0, %s69
      %s72 = sphi 0, %s71
      %s86 = sphi 0, %s72
      %s90 = sphi 0, %s90
      %s92 = sphi 0, %s90
      %s93 = sphi 0, %s92
      %s107 = sphi 0, %s93
      %s113 = sphi 0, %s115
      %s116 = sphi 0, %s113
      %s117 = sphi 0, %s116
      %s133 = sphi 0, %s117
    $region4: #{tpu_custom_call.1} parent=1 // loop_header_branch
      %17 = sbr.rel (%p15) target = $region8
    $region5: #{tpu_custom_call.1} parent=1 // loop_body
      %s19 = ssub.s32 %s14, 1
      %s20 = ssub.s32 %s14, 2
      %s21 = sadd.s32 %s14, 1
      %s22 = ssub.s32 %s14, %s21
      %p23 = scmp.eq.s32.totalorder %s22, 0
      %s25 = sadd.s32 %s24, 1
      %s26 = scalar_select %p23, %s24, %s25
      %p29 = pneg %p23
      %p30 = scmp.eq.s32.totalorder %s14, 1
      %p31 = por %p29, %p30
      %p32 = scmp.ne.s32.totalorder %s24, %s27
      %p33 = scmp.eq.s32.totalorder %s14, 0
      %p34 = por %p32, %p33
      %p35 = scmp.ne.s32.totalorder %s24, %s27
      %p36 = scmp.eq.s32.totalorder %s19, 1
      %p37 = por %p35, %p36
      %p38 = scmp.ne.s32.totalorder %s27, %s28
      %p39 = scmp.eq.s32.totalorder %s19, 0
      %p40 = por %p38, %p39
      %p41 = scmp.ne.s32.totalorder %s27, %s28
      %p42 = scmp.eq.s32.totalorder %s20, 1
      %p43 = por %p41, %p42
      %p45 = scmp.ne.s32.totalorder %s28, %s44
      %p46 = scmp.eq.s32.totalorder %s20, 0
      %p47 = por %p45, %p46
      %s49 = sadd.s32 %s48, 1
      %p52 = scmp.eq.s32.totalorder %s14, 1
      %p53 = scmp.ne.s32.totalorder %s48, %s50
      %p54 = scmp.eq.s32.totalorder %s14, 0
      %p55 = por %p53, %p54
      %p56 = scmp.ne.s32.totalorder %s48, %s50
      %p57 = scmp.eq.s32.totalorder %s19, 1
      %p58 = por %p56, %p57
      %p59 = scmp.ne.s32.totalorder %s50, %s51
      %p60 = scmp.eq.s32.totalorder %s19, 0
      %p61 = por %p59, %p60
      %p62 = scmp.ne.s32.totalorder %s50, %s51
      %p63 = scmp.eq.s32.totalorder %s20, 1
      %p64 = por %p62, %p63
      %p66 = scmp.ne.s32.totalorder %s51, %s65
      %p67 = scmp.eq.s32.totalorder %s20, 0
      %p68 = por %p66, %p67
      %s70 = sadd.s32 %s69, 1
      %p73 = scmp.eq.s32.totalorder %s14, 1
      %p74 = scmp.ne.s32.totalorder %s69, %s71
      %p75 = scmp.eq.s32.totalorder %s14, 0
      %p76 = por %p74, %p75
      %p77 = scmp.ne.s32.totalorder %s69, %s71
      %p78 = scmp.eq.s32.totalorder %s19, 1
      %p79 = por %p77, %p78
      %p80 = scmp.ne.s32.totalorder %s71, %s72
      %p81 = scmp.eq.s32.totalorder %s19, 0
      %p82 = por %p80, %p81
      %p83 = scmp.ne.s32.totalorder %s71, %s72
      %p84 = scmp.eq.s32.totalorder %s20, 1
      %p85 = por %p83, %p84
      %p87 = scmp.ne.s32.totalorder %s72, %s86
      %p88 = scmp.eq.s32.totalorder %s20, 0
      %p89 = por %p87, %p88
      %s91 = sadd.s32 %s90, 1
      %p94 = scmp.eq.s32.totalorder %s14, 1
      %p95 = scmp.ne.s32.totalorder %s90, %s92
      %p96 = scmp.eq.s32.totalorder %s14, 0
      %p97 = por %p95, %p96
      %p98 = scmp.ne.s32.totalorder %s90, %s92
      %p99 = scmp.eq.s32.totalorder %s19, 1
      %p100 = por %p98, %p99
      %p101 = scmp.ne.s32.totalorder %s92, %s93
      %p102 = scmp.eq.s32.totalorder %s19, 0
      %p103 = por %p101, %p102
      %p104 = scmp.ne.s32.totalorder %s92, %s93
      %p105 = scmp.eq.s32.totalorder %s20, 1
      %p106 = por %p104, %p105
      %p108 = scmp.ne.s32.totalorder %s93, %s107
      %p109 = scmp.eq.s32.totalorder %s20, 0
      %p110 = por %p108, %p109
      %s111 = ssub.s32 %s14, %s21
      %p112 = scmp.eq.s32.totalorder %s111, 0
      %s114 = sadd.s32 %s113, 1
      %s115 = scalar_select %p112, %s113, %s114
      %p118 = pneg %p112
      %p119 = scmp.eq.s32.totalorder %s14, 1
      %p120 = por %p118, %p119
      %p121 = scmp.ne.s32.totalorder %s113, %s116
      %p122 = scmp.eq.s32.totalorder %s14, 0
      %p123 = por %p121, %p122
      %p124 = scmp.ne.s32.totalorder %s113, %s116
      %p125 = scmp.eq.s32.totalorder %s19, 1
      %p126 = por %p124, %p125
      %p127 = scmp.ne.s32.totalorder %s116, %s117
      %p128 = scmp.eq.s32.totalorder %s19, 0
      %p129 = por %p127, %p128
      %p130 = scmp.ne.s32.totalorder %s116, %s117
      %p131 = scmp.eq.s32.totalorder %s20, 1
      %p132 = por %p130, %p131
      %p134 = scmp.ne.s32.totalorder %s117, %s133
      %p135 = scmp.eq.s32.totalorder %s20, 0
      %p136 = por %p134, %p135
      %p137 = scmp.le.s32.totalorder 1, %s14
      %p138 = scmp.lt.s32.totalorder %s14, 3
      %p139 = pnand %p137, %p138
      %p140 = pneg %p139
      // Predicated region
      $region9: #{tpu_custom_call.1} parent=5 // pred_check
        _
      $region10: #{tpu_custom_call.1} parent=5 // pred_check_branch
        %142 = sbr.rel (%p139) target = $region12
      $region11: #{tpu_custom_call.1} parent=5 // pred_region
        %s143 = ssub.s32 %s14, 1
        // Predicated region
        $region13: #{tpu_custom_call.1} parent=11 // pred_check
          %p144 = pneg %p61
        $region14: #{tpu_custom_call.1} parent=11 // pred_check_branch
          %146 = sbr.rel (%p144) target = $region16
        $region15: #{tpu_custom_call.1} parent=11 // pred_region
          _
        $region16: #{tpu_custom_call.1} parent=11 // pred_fallthru
          _
        // Predicated region
        $region17: #{tpu_custom_call.1} parent=11 // pred_check
          %p147 = pneg %p82
        $region18: #{tpu_custom_call.1} parent=11 // pred_check_branch
          %149 = sbr.rel (%p147) target = $region20
        $region19: #{tpu_custom_call.1} parent=11 // pred_region
          _
        $region20: #{tpu_custom_call.1} parent=11 // pred_fallthru
          _
        // Predicated region
        $region21: #{tpu_custom_call.1} parent=11 // pred_check
          %p150 = pneg %p103
        $region22: #{tpu_custom_call.1} parent=11 // pred_check_branch
          %152 = sbr.rel (%p150) target = $region24
        $region23: #{tpu_custom_call.1} parent=11 // pred_region
          %s154 = ssub.s32 1024, 1024
          %155 = vsyncadd [#allocation6], %s154
          %s156 = sshll.u32 [#allocation5], 4
          %s157 = int_to_ptr.vmem [resolvable:$true] %s156
          %162 = dma.hbm_to_vmem [thread:$0]  %s3, 1024, %s157, [#allocation6], 64, 64, 4
        $region24: #{tpu_custom_call.1} parent=11 // pred_fallthru
          _
      $region12: #{tpu_custom_call.1} parent=5 // pred_fallthru
        _
      %p163 = scmp.lt.s32.totalorder %s14, 2
      // Predicated region
      $region25: #{tpu_custom_call.1} parent=5 // pred_check
        %p164 = pneg %p163
      $region26: #{tpu_custom_call.1} parent=5 // pred_check_branch
        %166 = sbr.rel (%p164) target = $region28
      $region27: #{tpu_custom_call.1} parent=5 // pred_region
        // Predicated region
        $region29: #{tpu_custom_call.1} parent=27 // pred_check
          %p167 = pneg %p34
        $region30: #{tpu_custom_call.1} parent=27 // pred_check_branch
          %169 = sbr.rel (%p167) target = $region32
        $region31: #{tpu_custom_call.1} parent=27 // pred_region
          %s170 = smul.u32 2, %s14
          %p171 = scmp.lt.s32.totalorder %s170, 3
          %s172 = scalar_select %p171, %s170, 3
          %s173 = smul.addr %s172, 4
          %s174 = scalar_lea.vmem %s0, %s173
          %s175 = smul.u32 2, %s14
        $region32: #{tpu_custom_call.1} parent=27 // pred_fallthru
          _
      $region28: #{tpu_custom_call.1} parent=5 // pred_fallthru
        _
      %p176 = scmp.le.s32.totalorder 1, %s14
      %p177 = scmp.lt.s32.totalorder %s14, 3
      %p178 = pnand %p176, %p177
      %p179 = pneg %p178
      // Predicated region
      $region33: #{tpu_custom_call.1} parent=5 // pred_check
        _
      $region34: #{tpu_custom_call.1} parent=5 // pred_check_branch
        %181 = sbr.rel (%p178) target = $region36
      $region35: #{tpu_custom_call.1} parent=5 // pred_region
        %s182 = ssub.s32 %s14, 1
        // Predicated region
        $region37: #{tpu_custom_call.1} parent=35 // pred_check
          %p183 = pneg %p103
        $region38: #{tpu_custom_call.1} parent=35 // pred_check_branch
          %185 = sbr.rel (%p183) target = $region40
        $region39: #{tpu_custom_call.1} parent=35 // pred_region
          %186 = dma.done [#allocation6], 1024
        $region40: #{tpu_custom_call.1} parent=35 // pred_fallthru
          _
        %s187 = smul.u32 2, %s19
        %p188 = scmp.lt.s32.totalorder %s187, 3
        %s189 = scalar_select %p188, %s187, 3
        %s190 = smul.addr %s189, 4
        %s191 = scalar_lea.vmem %s0, %s190
        %p192 = pneg %p40
        %p193 = pneg %p37
        %p194 = pneg %p61
        %p195 = pneg %p58
        %p196 = pneg %p82
        %p197 = pneg %p79
        %p198 = pneg %p103
        %p199 = pneg %p100
        %p200 = pneg %p129
        %p201 = pneg %p126
        %s202 = sand.u32 %s116, 1
        %s203 = scalar_lea.sflag [#allocation7], %s202
        %s204 = sand.u32 %s116, 1
        %s205 = smul.addr %s204, 8
        %s206 = scalar_lea.vmem [#allocation8], %s205
        %s207 = smul.u32 2, %s19
        %p208 = scmp.lt.s32.totalorder %s207, 3
        %s209 = scalar_select %p208, %s207, 3
        %s210 = smul.addr %s209, 4
        %s211 = scalar_lea.vmem %s0, %s210
        %s212 = smul.u32 2, %s19
        %v214 = vld [vmem:[%s1] sm:$0xf]
        %v215 = vld [vmem:[%s1 + $0x4] sm:$0xf]
        %v216 = vld [vmem:[%s211] sm:$0xf]
        %v217 = vld [vmem:[%s211 + $0x4] sm:$0xf]
        %v220 = vunpack.c.l.b16 %v214
        %v221 = vunpack.c.l.b16 %v215
        %v222 = vpack.c.b16 %v221, %v220
        %v225 = vunpack.c.l.b16 %v216
        %v226 = vunpack.c.l.b16 %v217
        %v227 = vpack.c.b16 %v226, %v225
        %vm229 = vcmask 130048
        %v231 = vsel %vm229, %v222, 0
        %233 = vmatprep.subr.bf16.mxu0 0
        %234 = vmatpush1.bf16.msra.mxu0 %v227
        %235 = vmatprep.subr.bf16.mxu0 0
        %236 = vmatpush1.bf16.msra.mxu0 0
        %237 = vmatprep.subr.bf16.mxu0 0
        %238 = vmatpush1.bf16.msra.mxu0 0
        %239 = vmatprep.subr.bf16.mxu0 0
        %240 = vmatpush1.bf16.msra.mxu0 0
        %241 = vmatprep.subr.bf16.mxu0 0
        %242 = vmatpush1.bf16.msra.mxu0 0
        %243 = vmatprep.subr.bf16.mxu0 0
        %244 = vmatpush1.bf16.msra.mxu0 0
        %245 = vmatprep.subr.bf16.mxu0 0
        %246 = vmatpush1.bf16.msra.mxu0 0
        %247 = vmatprep.subr.bf16.mxu0 0
        %248 = vmatpush1.bf16.msra.mxu0 0
        %249 = vmatprep.subr.bf16.mxu0 0
        %250 = vmatpush1.bf16.msra.mxu0 0
        %251 = vmatprep.subr.bf16.mxu0 0
        %252 = vmatpush1.bf16.msra.mxu0 0
        %253 = vmatprep.subr.bf16.mxu0 0
        %254 = vmatpush1.bf16.msra.mxu0 0
        %255 = vmatprep.subr.bf16.mxu0 0
        %256 = vmatpush1.bf16.msra.mxu0 0
        %257 = vmatprep.subr.bf16.mxu0 0
        %258 = vmatpush1.bf16.msra.mxu0 0
        %259 = vmatprep.subr.bf16.mxu0 0
        %260 = vmatpush1.bf16.msra.mxu0 0
        %261 = vmatprep.subr.bf16.mxu0 0
        %262 = vmatpush1.bf16.msra.mxu0 0
        %263 = vmatprep.subr.bf16.mxu0 0
        %264 = vmatpush1.bf16.msra.mxu0 0
        %265 = vmatprep.mubr.bf16.mxu0 0
        %266 = vmatmul.mubr.bf16.gmra.mrb[0].mxu0 %v231
        %v267 = vpop.f32.mrb[0].mxu0
        %v268 = vadd.f32 0.0, %v267
        %v269 = vpop.f32.mrb[0].mxu0
        %v270 = vpop.f32.mrb[0].mxu0
        %v271 = vadd.f32 0.0, %v270
        %v272 = vpop.f32.mrb[0].mxu0
        %273 = vdwg.mxu0
        %v274 = vpack.c.bf16 %v271, %v268
        %vm275 = vcmask 64512
        %276 = vst.msk [vmem:[#allocation2] sm:$0xff] %vm275, %v274
        %v277 = vld [vmem:[#allocation2] sm:$0xff]
        %v278 = vld [vmem:[%s2] sm:$0xf]
        %v280 = vsel %vm275, %v277, 0
        %vm282 = vcmask 1043456
        %v284 = vsel %vm282, %v278, 0
        %286 = vmatprep.subr.bf16.mxu0 0
        %287 = vmatpush1.bf16.msra.mxu0 %v284
        %288 = vmatprep.subr.bf16.mxu0 0
        %289 = vmatpush1.bf16.msra.mxu0 0
        %290 = vmatprep.subr.bf16.mxu0 0
        %291 = vmatpush1.bf16.msra.mxu0 0
        %292 = vmatprep.subr.bf16.mxu0 0
        %293 = vmatpush1.bf16.msra.mxu0 0
        %294 = vmatprep.subr.bf16.mxu0 0
        %295 = vmatpush1.bf16.msra.mxu0 0
        %296 = vmatprep.subr.bf16.mxu0 0
        %297 = vmatpush1.bf16.msra.mxu0 0
        %298 = vmatprep.subr.bf16.mxu0 0
        %299 = vmatpush1.bf16.msra.mxu0 0
        %300 = vmatprep.subr.bf16.mxu0 0
        %301 = vmatpush1.bf16.msra.mxu0 0
        %302 = vmatprep.subr.bf16.mxu0 0
        %303 = vmatpush1.bf16.msra.mxu0 0
        %304 = vmatprep.subr.bf16.mxu0 0
        %305 = vmatpush1.bf16.msra.mxu0 0
        %306 = vmatprep.subr.bf16.mxu0 0
        %307 = vmatpush1.bf16.msra.mxu0 0
        %308 = vmatprep.subr.bf16.mxu0 0
        %309 = vmatpush1.bf16.msra.mxu0 0
        %310 = vmatprep.subr.bf16.mxu0 0
        %311 = vmatpush1.bf16.msra.mxu0 0
        %312 = vmatprep.subr.bf16.mxu0 0
        %313 = vmatpush1.bf16.msra.mxu0 0
        %314 = vmatprep.subr.bf16.mxu0 0
        %315 = vmatpush1.bf16.msra.mxu0 0
        %316 = vmatprep.subr.bf16.mxu0 0
        %317 = vmatpush1.bf16.msra.mxu0 0
        %318 = vmatprep.mubr.bf16.mxu0 0
        %319 = vmatmul.mubr.bf16.gmra.mrb[0].mxu0 %v280
        %v320 = vpop.f32.mrb[0].mxu0
        %v321 = vadd.f32 0.0, %v320
        %v322 = vpop.f32.mrb[0].mxu0
        %v323 = vpop.f32.mrb[0].mxu0
        %v324 = vadd.f32 0.0, %v323
        %v325 = vpop.f32.mrb[0].mxu0
        %326 = vdwg.mxu0
        %v327 = vmax.f32 %v321, 0.0
        %v328 = vmax.f32 %v324, 0.0
        %v329 = vpack.c.bf16 %v328, %v327
        %330 = vst [vmem:[#allocation3] sm:$0xff] %v329
        %v331 = vld [vmem:[#allocation3] sm:$0xff]
        %v332 = vld [vmem:[#allocation5] sm:$0xf]
        %v333 = vld [vmem:[#allocation5 + $0x4] sm:$0xf]
        %v334 = vld [vmem:[#allocation5 + $0x8] sm:$0xf]
        %v335 = vld [vmem:[#allocation5 + $0xc] sm:$0xf]
        %v336 = vld [vmem:[#allocation5 + $0x10] sm:$0xf]
        %v337 = vld [vmem:[#allocation5 + $0x14] sm:$0xf]
        %v338 = vld [vmem:[#allocation5 + $0x18] sm:$0xf]
        %v339 = vld [vmem:[#allocation5 + $0x1c] sm:$0xf]
        %v340 = vld [vmem:[#allocation5 + $0x20] sm:$0xf]
        %v341 = vld [vmem:[#allocation5 + $0x24] sm:$0xf]
        %v342 = vld [vmem:[#allocation5 + $0x28] sm:$0xf]
        %v343 = vld [vmem:[#allocation5 + $0x2c] sm:$0xf]
        %v344 = vld [vmem:[#allocation5 + $0x30] sm:$0xf]
        %v345 = vld [vmem:[#allocation5 + $0x34] sm:$0xf]
        %v346 = vld [vmem:[#allocation5 + $0x38] sm:$0xf]
        %v347 = vld [vmem:[#allocation5 + $0x3c] sm:$0xf]
        %v364 = vunpack.c.l.b16 %v332
        %v365 = vunpack.c.l.b16 %v333
        %v366 = vunpack.c.l.b16 %v334
        %v367 = vunpack.c.l.b16 %v335
        %v368 = vunpack.c.l.b16 %v336
        %v369 = vunpack.c.l.b16 %v337
        %v370 = vunpack.c.l.b16 %v338
        %v371 = vunpack.c.l.b16 %v339
        %v372 = vunpack.c.l.b16 %v340
        %v373 = vunpack.c.l.b16 %v341
        %v374 = vunpack.c.l.b16 %v342
        %v375 = vunpack.c.l.b16 %v343
        %v376 = vunpack.c.l.b16 %v344
        %v377 = vunpack.c.l.b16 %v345
        %v378 = vunpack.c.l.b16 %v346
        %v379 = vunpack.c.l.b16 %v347
        %v380 = vpack.c.b16 %v365, %v364
        %v381 = vpack.c.b16 %v367, %v366
        %v382 = vpack.c.b16 %v369, %v368
        %v383 = vpack.c.b16 %v371, %v370
        %v384 = vpack.c.b16 %v373, %v372
        %v385 = vpack.c.b16 %v375, %v374
        %v386 = vpack.c.b16 %v377, %v376
        %v387 = vpack.c.b16 %v379, %v378
        %396 = vmatprep.subr.bf16.mxu0 0
        %397 = vmatpush1.bf16.msra.mxu0 %v380
        %398 = vmatprep.subr.bf16.mxu0 0
        %399 = vmatpush1.bf16.msra.mxu0 %v381
        %400 = vmatprep.subr.bf16.mxu0 0
        %401 = vmatpush1.bf16.msra.mxu0 %v382
        %402 = vmatprep.subr.bf16.mxu0 0
        %403 = vmatpush1.bf16.msra.mxu0 %v383
        %404 = vmatprep.subr.bf16.mxu0 0
        %405 = vmatpush1.bf16.msra.mxu0 %v384
        %406 = vmatprep.subr.bf16.mxu0 0
        %407 = vmatpush1.bf16.msra.mxu0 %v385
        %408 = vmatprep.subr.bf16.mxu0 0
        %409 = vmatpush1.bf16.msra.mxu0 %v386
        %410 = vmatprep.subr.bf16.mxu0 0
        %411 = vmatpush1.bf16.msra.mxu0 %v387
        %412 = vmatprep.subr.bf16.mxu0 0
        %413 = vmatpush1.bf16.msra.mxu0 0
        %414 = vmatprep.subr.bf16.mxu0 0
        %415 = vmatpush1.bf16.msra.mxu0 0
        %416 = vmatprep.subr.bf16.mxu0 0
        %417 = vmatpush1.bf16.msra.mxu0 0
        %418 = vmatprep.subr.bf16.mxu0 0
        %419 = vmatpush1.bf16.msra.mxu0 0
        %420 = vmatprep.subr.bf16.mxu0 0
        %421 = vmatpush1.bf16.msra.mxu0 0
        %422 = vmatprep.subr.bf16.mxu0 0
        %423 = vmatpush1.bf16.msra.mxu0 0
        %424 = vmatprep.subr.bf16.mxu0 0
        %425 = vmatpush1.bf16.msra.mxu0 0
        %426 = vmatprep.subr.bf16.mxu0 0
        %427 = vmatpush1.bf16.msra.mxu0 0
        %428 = vmatprep.mubr.bf16.mxu0 0
        %429 = vmatmul.mubr.bf16.gmra.mrb[0].mxu0 %v331
        %v430 = vpop.f32.mrb[0].mxu0
        %v431 = vadd.f32 0.0, %v430
        %v432 = vpop.f32.mrb[0].mxu0
        %v433 = vpop.f32.mrb[0].mxu0
        %v434 = vadd.f32 0.0, %v433
        %v435 = vpop.f32.mrb[0].mxu0
        %436 = vdwg.mxu0
        %v437 = vpack.c.bf16 %v434, %v431
        %438 = vst [vmem:[#allocation4] sm:$0xff] %v437
        %v439 = vld [vmem:[#allocation4] sm:$0xff]
        %440 = vmatprep.subr.bf16.mxu0 0
        %441 = vmatpush1.bf16.msra.mxu0 %v439
        %442 = vmatprep.subr.bf16.mxu0 0
        %443 = vmatpush1.bf16.msra.mxu0 0
        %444 = vmatprep.subr.bf16.mxu0 0
        %445 = vmatpush1.bf16.msra.mxu0 0
        %446 = vmatprep.subr.bf16.mxu0 0
        %447 = vmatpush1.bf16.msra.mxu0 0
        %448 = vmatprep.subr.bf16.mxu0 0
        %449 = vmatpush1.bf16.msra.mxu0 0
        %450 = vmatprep.subr.bf16.mxu0 0
        %451 = vmatpush1.bf16.msra.mxu0 0
        %452 = vmatprep.subr.bf16.mxu0 0
        %453 = vmatpush1.bf16.msra.mxu0 0
        %454 = vmatprep.subr.bf16.mxu0 0
        %455 = vmatpush1.bf16.msra.mxu0 0
        %456 = vmatprep.subr.bf16.mxu0 0
        %457 = vmatpush1.bf16.msra.mxu0 0
        %458 = vmatprep.subr.bf16.mxu0 0
        %459 = vmatpush1.bf16.msra.mxu0 0
        %460 = vmatprep.subr.bf16.mxu0 0
        %461 = vmatpush1.bf16.msra.mxu0 0
        %462 = vmatprep.subr.bf16.mxu0 0
        %463 = vmatpush1.bf16.msra.mxu0 0
        %464 = vmatprep.subr.bf16.mxu0 0
        %465 = vmatpush1.bf16.msra.mxu0 0
        %466 = vmatprep.subr.bf16.mxu0 0
        %467 = vmatpush1.bf16.msra.mxu0 0
        %468 = vmatprep.subr.bf16.mxu0 0
        %469 = vmatpush1.bf16.msra.mxu0 0
        %470 = vmatprep.subr.bf16.mxu0 0
        %471 = vmatpush1.bf16.msra.mxu0 0
        %472 = vmatprep.mubr.bf16.mxu0 0
        %473 = vmatmul.mubr.bf16.gmra.mrb[0].mxu0 %v231
        %v474 = vpop.f32.mrb[0].mxu0
        %v475 = vadd.f32 0.0, %v474
        %v476 = vpop.f32.mrb[0].mxu0
        %v477 = vpop.f32.mrb[0].mxu0
        %v478 = vadd.f32 0.0, %v477
        %v479 = vpop.f32.mrb[0].mxu0
        %480 = vdwg.mxu0
        %v481 = vmax.f32 %v475, 0.0
        %v482 = vmax.f32 %v478, 0.0
        %v483 = vxor.u32 %v481, 2147483648
        %v484 = vxor.u32 %v482, 2147483648
        %v485 = vmul.f32 %v483, 1.442695
        %v486 = vpow.pop %v485
        %v487 = vmul.f32 %v484, 1.442695
        %v488 = vpow.pop %v487
        %v489 = vadd.f32 %v486, 1.0
        %v490 = vadd.f32 %v488, 1.0
        %v491 = vrcp.pop %v489
        %v492 = vmul.f32 1.0, %v491
        %v493 = vrcp.pop %v490
        %v494 = vmul.f32 1.0, %v493
        %v495 = vpack.c.bf16 %v494, %v492
        %v497 = vunpack.c.l.b16 %v495
        %v498 = vunpack.c.h.b16 %v495
        %v499 = vpack.c.b16 %v497, %v497
        %v500 = vpack.c.b16 %v498, %v498
        %503 = vst [vmem:[%s206] sm:$0xf] %v499
        %504 = vst [vmem:[%s206 + $0x4] sm:$0xf] %v500
        %s505 = sand.u32 %s116, 1
        %s506 = scalar_lea.sflag [#allocation7], %s505
        %s507 = sand.u32 %s116, 1
        %s508 = smul.addr %s507, 8
        %s509 = scalar_lea.vmem [#allocation8], %s508
        // Predicated region
        $region41: #{tpu_custom_call.1} parent=35 // pred_check
          %p510 = pneg %p126
        $region42: #{tpu_custom_call.1} parent=35 // pred_check_branch
          %512 = sbr.rel (%p510) target = $region44
        $region43: #{tpu_custom_call.1} parent=35 // pred_region
          %s514 = ssub.s32 128, 128
          %515 = vsyncadd %s506, %s514
          %s516 = smul.addr %s19, 2
          %s517 = smul.addr %s516, 64
          %s518 = scalar_lea.hbm %s4, %s517
          %s519 = sshll.u32 %s509, 4
          %s520 = int_to_ptr.vmem [resolvable:$true] %s519
          %525 = dma.vmem_to_hbm [thread:$0]  %s520, 128, %s518, %s506, 64, 64, 4
        $region44: #{tpu_custom_call.1} parent=35 // pred_fallthru
          _
      $region36: #{tpu_custom_call.1} parent=5 // pred_fallthru
        _
      %p526 = scmp.le.s32.totalorder 2, %s14
      // Predicated region
      $region45: #{tpu_custom_call.1} parent=5 // pred_check
        %p527 = pneg %p526
      $region46: #{tpu_custom_call.1} parent=5 // pred_check_branch
        %529 = sbr.rel (%p527) target = $region48
      $region47: #{tpu_custom_call.1} parent=5 // pred_region
        %s530 = ssub.s32 %s14, 2
        // Predicated region
        $region49: #{tpu_custom_call.1} parent=47 // pred_check
          %p531 = pneg %p132
        $region50: #{tpu_custom_call.1} parent=47 // pred_check_branch
          %533 = sbr.rel (%p531) target = $region52
        $region51: #{tpu_custom_call.1} parent=47 // pred_region
          %s534 = sand.u32 %s117, 1
          %s535 = scalar_lea.sflag [#allocation7], %s534
          %s536 = sand.u32 %s117, 1
          %s537 = smul.addr %s536, 8
          %s538 = scalar_lea.vmem [#allocation8], %s537
          %539 = dma.done %s535, 128
        $region52: #{tpu_custom_call.1} parent=47 // pred_fallthru
          _
      $region48: #{tpu_custom_call.1} parent=5 // pred_fallthru
        _
    $region6: #{tpu_custom_call.1} parent=1 // loop_footer
      %s18 = sadd.s32 1, %s14
    $region7: #{tpu_custom_call.1} parent=1 // loop_footer_branch
      %13 = sbr.rel target = $region3
    $region8: #{tpu_custom_call.1} parent=1 // loop_exit
      _
    %540 = vsyncpa [#allocation6], 1
    %s541 = scalar_lea.sflag [#allocation6], 1
    %542 = vsyncpa %s541, 1
    %543 = vsyncpa [#allocation7], 1
    %s544 = scalar_lea.sflag [#allocation7], 1
    %545 = vsyncpa %s544, 1

</llo_original>
